<compile_context>
chip_gen: v7x
topology: tpu7x:2x2x1
jax: 0.10.0
libtpu: 0.0.40
codegen_flags: <defaults>
</compile_context>

<pallas_src>
import math
import functools

import jax
import jax.numpy as jnp
from jax import lax
from jax.experimental import pallas as pl
from jax.experimental.pallas import tpu as pltpu


# ----------------------------------------------------------------------------
# Parameter setup (matches torch __init__ exactly, deterministic)
# ----------------------------------------------------------------------------
def make_pos_embedding(emb_size: int, maxlen: int = 5000) -> jnp.ndarray:
    den = jnp.exp(-jnp.arange(0, emb_size, 2, dtype=jnp.float32)
                  * math.log(10000.0) / emb_size)                      # (E/2,)
    pos = jnp.arange(0, maxlen, dtype=jnp.float32).reshape(maxlen, 1)  # (maxlen,1)
    pe = jnp.zeros((maxlen, emb_size), dtype=jnp.float32)
    pe = pe.at[:, 0::2].set(jnp.sin(pos * den))
    pe = pe.at[:, 1::2].set(jnp.cos(pos * den))
    return pe[:, None, :]                                              # (maxlen,1,E)


# ----------------------------------------------------------------------------
# Pallas kernels
# ----------------------------------------------------------------------------
def _pe_add_kernel(x_ref, pe_ref, o_ref):
    # x_ref: (TS, B, E); pe_ref: (TS, E) broadcast over the batch (sublane) axis.
    pe_b = lax.broadcast_in_dim(pe_ref[...], x_ref.shape, (0, 2))
    o_ref[...] = (x_ref[...] + pe_b).astype(o_ref.dtype)


def _pe_add_dropout_kernel(seed_ref, x_ref, pe_ref, o_ref, *,
                           keep_prob: float, rows_per_block: int,
                           use_hw_prng: bool):
    ts, b, e = x_ref.shape
    pe_b = lax.broadcast_in_dim(pe_ref[...], (ts, b, e), (0, 2))
    y = x_ref[...] + pe_b

    thresh = jnp.uint32(min(int(keep_prob * 2.0 ** 32), 2 ** 32 - 1))
    if use_hw_prng:
        # TPU hardware PRNG; seed with (user seed, tile id) so per-tile masks
        # come from independent streams rather than adjacent scalar seeds.
        pltpu.prng_seed(seed_ref[0], pl.program_id(0))
        bits = pltpu.bitcast(pltpu.prng_random_bits((ts, b, e)), jnp.uint32)
    else:
        # Stateless counter-based hash (murmur3 finalizer) over the global
        # element index; lowers on any backend (incl. CPU/interpret where the
        # TPU PRNG primitives have no lowering rule).
        row = lax.broadcasted_iota(jnp.uint32, (ts, b, e), 0)
        sub = lax.broadcasted_iota(jnp.uint32, (ts, b, e), 1)
        lane = lax.broadcasted_iota(jnp.uint32, (ts, b, e), 2)
        gid = pl.program_id(0).astype(jnp.uint32) * jnp.uint32(rows_per_block) + row
        idx = (gid * jnp.uint32(b) + sub) * jnp.uint32(e) + lane
        h = idx ^ (seed_ref[0].astype(jnp.uint32) * jnp.uint32(0x9E3779B1))
        h = h ^ (h >> 16)
        h = h * jnp.uint32(0x85EBCA6B)
        h = h ^ (h >> 13)
        h = h * jnp.uint32(0xC2B2AE35)
        h = h ^ (h >> 16)
        bits = h

    keep = bits < thresh                       # unsigned compare
    inv_keep = float(1.0 / keep_prob)          # weak-typed: stays in x dtype
    # one select + one multiply keeps the VALU chain minimal (v7x headroom)
    o_ref[...] = (jnp.where(keep, y, 0.0) * inv_keep).astype(o_ref.dtype)


# ----------------------------------------------------------------------------
# Tiling helpers
# ----------------------------------------------------------------------------
def _round_up(x: int, m: int) -> int:
    return ((x + m - 1) // m) * m


def _sublane_pack(itemsize: int) -> int:
    return {4: 8, 2: 16, 1: 32}.get(itemsize, 8)


def _target_tile_bytes() -> int:
    # v6e/v7x HBM is fast enough that ~6 MiB tiles are needed to keep the
    # ~0.35-0.6 us per-grid-step overhead <10%; v5e amortizes it at 2-4 MiB.
    try:
        if jax.default_backend() == "tpu":
            kind = jax.devices()[0].device_kind.lower()
            if "v5 lite" in kind or "v5e" in kind:
                return 3 << 20
    except Exception:
        pass
    return 6 << 20


def _pick_seq_tile(S: int, B: int, E: int, itemsize: int, target_bytes: int) -> int:
    """Fixed sequence-tile length: multiple of 8 (needed for the 2-D pe block),
    sized from *padded* per-row bytes; ragged last block instead of divisor search."""
    row_bytes = _round_up(B, _sublane_pack(itemsize)) * _round_up(E, 128) * itemsize
    ts = max(1, target_bytes // row_bytes)
    if ts >= S:
        return S
    ts = max(8, (ts // 8) * 8)
    # Prefer >= 4 grid steps when S allows so v7x's two TensorCores both get an
    # even share of the 'parallel' axis (no-op for single-TC v5e/v6e).
    if S >= 32:
        ts = min(ts, _round_up(pl.cdiv(S, 4), 8))
    return min(ts, S)


def _compiler_params(ts: int, B: int, E: int, itemsize: int,
                     with_dropout: bool) -> pltpu.CompilerParams:
    bp = _round_up(B, _sublane_pack(itemsize))
    ep = _round_up(E, 128)
    x_tile = ts * bp * ep * itemsize
    pe_tile = _round_up(ts, 8) * ep * itemsize
    total = 4 * x_tile + 2 * pe_tile               # double-buffered x-in + out + pe
    if with_dropout:
        total += 2 * ts * bp * ep * 4              # uint32 bits / mask intermediates
    vmem_limit = int(min(48 << 20, max(8 << 20, total + (2 << 20))))
    return pltpu.CompilerParams(
        dimension_semantics=("parallel",),
        vmem_limit_bytes=vmem_limit,
    )


# ----------------------------------------------------------------------------
# Wrapper
# ----------------------------------------------------------------------------
def positional_encoding(token_embedding: jnp.ndarray,
                        pos_embedding: jnp.ndarray,
                        dropout: float = 0.1,
                        training: bool = False,
                        seed: int = 0,
                        seq_tile: int | None = None) -> jnp.ndarray:
    """token_embedding: (S, B, E); pos_embedding: (maxlen, 1, E)."""
    S, B, E = token_embedding.shape
    dtype = token_embedding.dtype
    # Dense 2-D pe slab in the input dtype (lane/sublane-dense, no f32 promotion).
    pe2d = pos_embedding[:S, 0, :].astype(dtype)                       # (S, E)

    itemsize = jnp.dtype(dtype).itemsize
    use_dropout = bool(training) and float(dropout) > 0.0
    target = _target_tile_bytes()
    if use_dropout:
        target = min(target, 4 << 20)   # leave room for the uint32 bit buffer
    TS = seq_tile if seq_tile is not None else _pick_seq_tile(S, B, E, itemsize, target)
    grid = (pl.cdiv(S, TS),)            # ragged last block is fine (elementwise)
    out_shape = jax.ShapeDtypeStruct((S, B, E), dtype)
    cparams = _compiler_params(TS, B, E, itemsize, use_dropout)

    if not use_dropout:
        # eval-mode dropout is identity -> pure pipelined broadcast add
        x_spec = pl.BlockSpec((TS, B, E), lambda s: (s, 0, 0))
        pe_spec = pl.BlockSpec((TS, E), lambda s: (s, 0))
        return pl.pallas_call(
            _pe_add_kernel,
            out_shape=out_shape,
            grid=grid,
            in_specs=[x_spec, pe_spec],
            out_specs=x_spec,
            input_output_aliases={0: 0},           # donate x (identical tiling)
            compiler_params=cparams,
        )(token_embedding, pe2d)

    keep_prob = 1.0 - float(dropout)
    seed_arr = jnp.asarray([seed], dtype=jnp.int32)
    use_hw_prng = jax.default_backend() == "tpu"   # TPU PRNG has no CPU lowering
    # With scalar prefetch, every index_map receives the prefetch ref(s)
    # positionally after the grid indices.
    x_spec = pl.BlockSpec((TS, B, E), lambda s, seed_ref: (s, 0, 0))
    pe_spec = pl.BlockSpec((TS, E), lambda s, seed_ref: (s, 0))
    kernel = functools.partial(_pe_add_dropout_kernel,
                               keep_prob=keep_prob,
                               rows_per_block=TS,
                               use_hw_prng=use_hw_prng)
    return pl.pallas_call(
        kernel,
        out_shape=out_shape,
        grid_spec=pltpu.PrefetchScalarGridSpec(
            num_scalar_prefetch=1,                 # seed lands in SMEM
            grid=grid,
            in_specs=[x_spec, pe_spec],
            out_specs=x_spec,
        ),
        input_output_aliases={1: 0},               # x is operand 1 (after the seed)
        compiler_params=cparams,
    )(seed_arr, token_embedding, pe2d)


# ----------------------------------------------------------------------------
# Test
# ----------------------------------------------------------------------------
if __name__ == "__main__":
    emb_size = 32
    seq_len = 8
    batch = 2
    maxlen = 64          # small maxlen for the test; semantics identical

    key = jax.random.PRNGKey(0)
    x = jax.random.normal(key, (seq_len, batch, emb_size), dtype=jnp.float32)
    pe = make_pos_embedding(emb_size, maxlen)

    # eval-mode forward (dropout = identity), matches PyTorch module.eval()
    out = positional_encoding(x, pe, dropout=0.1, training=False)
    out = jax.block_until_ready(out)
    ref = x + pe[:seq_len]
    assert out.shape == (seq_len, batch, emb_size)
    assert jnp.allclose(out, ref, atol=1e-6), "mismatch vs reference (eval)"

    # multi-tile path with a ragged last block (forced small tile)
    key2 = jax.random.PRNGKey(1)
    x2 = jax.random.normal(key2, (20, batch, emb_size), dtype=jnp.float32)
    out2 = positional_encoding(x2, pe, dropout=0.1, training=False, seq_tile=8)
    out2 = jax.block_until_ready(out2)
    ref2 = x2 + pe[:20]
    assert jnp.allclose(out2, ref2, atol=1e-6), "mismatch vs reference (tiled)"

    # training-mode path (fused inverted dropout)
    out_tr = positional_encoding(x, pe, dropout=0.1, training=True, seed=42)
    out_tr = jax.block_until_ready(out_tr)
    assert out_tr.shape == (seq_len, batch, emb_size)
    keep_prob = 0.9
    scaled = ref / keep_prob
    close_kept = jnp.isclose(out_tr, scaled, rtol=1e-5, atol=1e-5)
    close_drop = jnp.isclose(out_tr, 0.0, atol=1e-6)
    assert bool(jnp.all(close_kept | close_drop)), "dropout values not {0, y/keep_prob}"
    drop_frac = float(jnp.mean(close_drop & ~close_kept))
    assert 0.0 < drop_frac < 0.5, "dropout fraction implausible for p=0.1"

    print("KERNEL_OK")
</pallas_src>

<mosaic_0001>
module attributes {stable_mosaic.version = 11 : i64} {
  func.func @_pe_add_kernel(%arg0: i32, %arg1: memref<8x2x32xf32, #tpu.memory_space<vmem>>, %arg2: memref<8x32xf32, #tpu.memory_space<vmem>>, %arg3: memref<8x2x32xf32, #tpu.memory_space<vmem>>) attributes {dimension_semantics = [#tpu.dimension_semantics<parallel>], iteration_bounds = array<i64: 1>, scalar_prefetch = 0 : i64, scratch_operands = 0 : i64, tpu.core_type = #tpu.core_type<tc>, window_params = [{transform_indices = @transform_0, window_bounds = array<i64: 8, 2, 32>}, {transform_indices = @transform_1, window_bounds = array<i64: 8, 32>}, {transform_indices = @transform_2, window_bounds = array<i64: 8, 2, 32>}]} {
    %c0 = arith.constant 0 : index
    %c0_0 = arith.constant 0 : index
    %0 = vector.load %arg2[%c0, %c0_0] : memref<8x32xf32, #tpu.memory_space<vmem>>, vector<8x32xf32>
    %1 = vector.shape_cast %0 : vector<8x32xf32> to vector<8x1x32xf32>
    %2 = vector.broadcast %1 : vector<8x1x32xf32> to vector<8x2x32xf32>
    %c0_1 = arith.constant 0 : index
    %c0_2 = arith.constant 0 : index
    %c0_3 = arith.constant 0 : index
    %3 = vector.load %arg1[%c0_1, %c0_2, %c0_3] : memref<8x2x32xf32, #tpu.memory_space<vmem>>, vector<8x2x32xf32>
    %4 = arith.addf %3, %2 : vector<8x2x32xf32>
    %c0_4 = arith.constant 0 : index
    %c0_5 = arith.constant 0 : index
    %c0_6 = arith.constant 0 : index
    %5 = vector.load %arg3[%c0_4, %c0_5, %c0_6] : memref<8x2x32xf32, #tpu.memory_space<vmem>>, vector<8x2x32xf32>
    tpu.vector_store %arg3[%c0_4, %c0_5, %c0_6], %4 {strides = array<i32>} : memref<8x2x32xf32, #tpu.memory_space<vmem>>, vector<8x2x32xf32>,
    return
  }
  func.func @transform_0(%arg0: i32) -> (i32, i32, i32) {
    %c0_i32 = arith.constant 0 : i32
    %c0_i32_0 = arith.constant 0 : i32
    %c0_i32_1 = arith.constant 0 : i32
    return %arg0, %c0_i32, %c0_i32_0 : i32, i32, i32
  }
  func.func @transform_1(%arg0: i32) -> (i32, i32) {
    %c0_i32 = arith.constant 0 : i32
    %c0_i32_0 = arith.constant 0 : i32
    return %arg0, %c0_i32 : i32, i32
  }
  func.func @transform_2(%arg0: i32) -> (i32, i32, i32) {
    %c0_i32 = arith.constant 0 : i32
    %c0_i32_0 = arith.constant 0 : i32
    %c0_i32_1 = arith.constant 0 : i32
    return %arg0, %c0_i32, %c0_i32_0 : i32, i32, i32
  }
}

</mosaic_0001>

<llo_original>
// kernel: tpu_custom_call.1
$region0: #{tpu_custom_call.1}
  #allocation0 [shape = 'u32[]', space=smem, size = 0x4, offset = 0x4, fixed_abs, tag = 'smem constant byte address 0x4 - core index']
  #allocation1 [shape = 'u32[144,128]{1,0:T(1,128)}', space=vmem, size = 0x12000, scoped, tag = 'internal scratch']
  %s0 = inlined_call_operand.hbm [shape: f32[8,2,32], index: 0, kind: input, shape index: {}, may-alias: {0,2}]
  %s1 = inlined_call_operand.vmem [shape: f32[8,32], index: 1, kind: input, shape index: {}]
  %s2 = inlined_call_operand.hbm [shape: f32[8,2,32], index: 2, kind: output, shape index: {}, may-alias: {0,2}]
  %s3 = sld [smem:[#allocation0]]
  $region22: #{tpu_custom_call.1} parent=0
    _
  %s5 = ssub.s32 1, %s3
  %s6 = scalar_select 0, %s5, %s3
  $region1: #{tpu_custom_call.1} parent=0
    #allocation2 [shape = 'u8[8192]{0}', space=vmem, size = 0x2000, scoped, tag = 'input window, operand 0, single buffered']
    #allocation3 [shape = 's32[1]{0}', space=sflag, size = 0x4, scoped, tag = 'scoped memory for tpu_custom_call.1']
    #allocation4 [shape = 's32[1]{0}', space=sflag, size = 0x4, scoped, tag = 'scoped memory for tpu_custom_call.1']
    #allocation5 [shape = 'u8[8192]{0}', space=vmem, size = 0x2000, scoped, tag = 'output window, operand 0, single buffered']
    %7 = vsyncpa [#allocation3], 0
    %8 = vsyncpa [#allocation4], 0
    // Predicated region
    $region2: #{tpu_custom_call.1} parent=1 // pred_check
      _
    $region3: #{tpu_custom_call.1} parent=1 // pred_check_branch
      %10 = sbr.rel (0) target = $region5
    $region4: #{tpu_custom_call.1} parent=1 // pred_region
      %s12 = ssub.s32 256, 256
      %13 = vsyncadd [#allocation3], %s12
      %s14 = sshll.u32 [#allocation2], 4
      %s15 = int_to_ptr.vmem [resolvable:$true] %s14
      %20 = dma.hbm_to_vmem [thread:$0]  %s0, 256, %s15, [#allocation3], 32, 32, 2
    $region5: #{tpu_custom_call.1} parent=1 // pred_fallthru
      _
    // Predicated region
    $region6: #{tpu_custom_call.1} parent=1 // pred_check
      _
    $region7: #{tpu_custom_call.1} parent=1 // pred_check_branch
      %22 = sbr.rel (0) target = $region9
    $region8: #{tpu_custom_call.1} parent=1 // pred_region
      _
    $region9: #{tpu_custom_call.1} parent=1 // pred_fallthru
      _
    // Predicated region
    $region10: #{tpu_custom_call.1} parent=1 // pred_check
      _
    $region11: #{tpu_custom_call.1} parent=1 // pred_check_branch
      %24 = sbr.rel (0) target = $region13
    $region12: #{tpu_custom_call.1} parent=1 // pred_region
      %25 = dma.done [#allocation3], 256
    $region13: #{tpu_custom_call.1} parent=1 // pred_fallthru
      _
    %v26 = vld [vmem:[%s1] sm:$0xff]
    %v28 = vcombine.high %v26, %v26
    %v30 = vunpack.c.l.s4 1966171168
    %v31 = vunpack.c.0.s8 %v30
    %v32 = vlaneseq
    %v33 = vshrl.u32 %v32, 7
    %v34 = vsub.s32 %v31, %v33
    %v35 = vrot.slane %v26, %v34
    %v37 = vunpack.c.l.s4 1966171168
    %v38 = vunpack.c.0.s8 %v37
    %v39 = vlaneseq
    %v40 = vshrl.u32 %v39, 7
    %v41 = vsub.s32 %v38, %v40
    %v42 = vrot.slane %v28, %v41
    %v43 = vcombine.high %v35, %v35
    %v44 = vcombine.high %v42, %v42
    %v46 = vunpack.c.l.s4 1966171168
    %v47 = vunpack.c.0.s8 %v46
    %v48 = vlaneseq
    %v49 = vshrl.u32 %v48, 7
    %v50 = vsub.s32 %v47, %v49
    %v51 = vrot.slane %v35, %v50
    %v53 = vunpack.c.l.s4 1966171168
    %v54 = vunpack.c.0.s8 %v53
    %v55 = vlaneseq
    %v56 = vshrl.u32 %v55, 7
    %v57 = vsub.s32 %v54, %v56
    %v58 = vrot.slane %v42, %v57
    %v60 = vunpack.c.l.s4 1966171168
    %v61 = vunpack.c.0.s8 %v60
    %v62 = vlaneseq
    %v63 = vshrl.u32 %v62, 7
    %v64 = vsub.s32 %v61, %v63
    %v65 = vrot.slane %v43, %v64
    %v67 = vunpack.c.l.s4 1966171168
    %v68 = vunpack.c.0.s8 %v67
    %v69 = vlaneseq
    %v70 = vshrl.u32 %v69, 7
    %v71 = vsub.s32 %v68, %v70
    %v72 = vrot.slane %v44, %v71
    %v73 = vcombine.high %v51, %v51
    %v74 = vcombine.high %v58, %v58
    %v75 = vcombine.high %v65, %v65
    %v76 = vcombine.high %v72, %v72
    %v77 = vlaneseq
    %v78 = vshrl.u32 %v77, 7
    %v79 = vsub.s32 0, %v78
    %v80 = vrot.slane %v51, %v79
    %v81 = vlaneseq
    %v82 = vshrl.u32 %v81, 7
    %v83 = vsub.s32 0, %v82
    %v84 = vrot.slane %v65, %v83
    %v85 = vlaneseq
    %v86 = vshrl.u32 %v85, 7
    %v87 = vsub.s32 0, %v86
    %v88 = vrot.slane %v73, %v87
    %v89 = vlaneseq
    %v90 = vshrl.u32 %v89, 7
    %v91 = vsub.s32 0, %v90
    %v92 = vrot.slane %v75, %v91
    %v93 = vlaneseq
    %v94 = vshrl.u32 %v93, 7
    %v95 = vsub.s32 0, %v94
    %v96 = vrot.slane %v58, %v95
    %v97 = vlaneseq
    %v98 = vshrl.u32 %v97, 7
    %v99 = vsub.s32 0, %v98
    %v100 = vrot.slane %v72, %v99
    %v101 = vlaneseq
    %v102 = vshrl.u32 %v101, 7
    %v103 = vsub.s32 0, %v102
    %v104 = vrot.slane %v74, %v103
    %v105 = vlaneseq
    %v106 = vshrl.u32 %v105, 7
    %v107 = vsub.s32 0, %v106
    %v108 = vrot.slane %v76, %v107
    %v117 = vld [vmem:[#allocation2] sm:$0x3]
    %v118 = vld [vmem:[#allocation2 + $0x2] sm:$0x3]
    %v119 = vld [vmem:[#allocation2 + $0x4] sm:$0x3]
    %v120 = vld [vmem:[#allocation2 + $0x6] sm:$0x3]
    %v121 = vld [vmem:[#allocation2 + $0x8] sm:$0x3]
    %v122 = vld [vmem:[#allocation2 + $0xa] sm:$0x3]
    %v123 = vld [vmem:[#allocation2 + $0xc] sm:$0x3]
    %v124 = vld [vmem:[#allocation2 + $0xe] sm:$0x3]
    %v125 = vadd.f32 %v117, %v80
    %v126 = vadd.f32 %v118, %v84
    %v127 = vadd.f32 %v119, %v88
    %v128 = vadd.f32 %v120, %v92
    %v129 = vadd.f32 %v121, %v96
    %v130 = vadd.f32 %v122, %v100
    %v131 = vadd.f32 %v123, %v104
    %v132 = vadd.f32 %v124, %v108
    %vm133 = vcmask 254976
    %134 = vst.msk [vmem:[#allocation5] sm:$0x3] %vm133, %v125
    %135 = vst.msk [vmem:[#allocation5 + $0x2] sm:$0x3] %vm133, %v126
    %136 = vst.msk [vmem:[#allocation5 + $0x4] sm:$0x3] %vm133, %v127
    %137 = vst.msk [vmem:[#allocation5 + $0x6] sm:$0x3] %vm133, %v128
    %138 = vst.msk [vmem:[#allocation5 + $0x8] sm:$0x3] %vm133, %v129
    %139 = vst.msk [vmem:[#allocation5 + $0xa] sm:$0x3] %vm133, %v130
    %140 = vst.msk [vmem:[#allocation5 + $0xc] sm:$0x3] %vm133, %v131
    %141 = vst.msk [vmem:[#allocation5 + $0xe] sm:$0x3] %vm133, %v132
    // Predicated region
    $region14: #{tpu_custom_call.1} parent=1 // pred_check
      _
    $region15: #{tpu_custom_call.1} parent=1 // pred_check_branch
      %143 = sbr.rel (0) target = $region17
    $region16: #{tpu_custom_call.1} parent=1 // pred_region
      %s145 = ssub.s32 256, 256
      %146 = vsyncadd [#allocation4], %s145
      %s147 = sshll.u32 [#allocation5], 4
      %s148 = int_to_ptr.vmem [resolvable:$true] %s147
      %153 = dma.vmem_to_hbm [thread:$0]  %s148, 256, %s2, [#allocation4], 32, 32, 2
    $region17: #{tpu_custom_call.1} parent=1 // pred_fallthru
      _
    // Predicated region
    $region18: #{tpu_custom_call.1} parent=1 // pred_check
      _
    $region19: #{tpu_custom_call.1} parent=1 // pred_check_branch
      %155 = sbr.rel (0) target = $region21
    $region20: #{tpu_custom_call.1} parent=1 // pred_region
      %156 = dma.done [#allocation4], 256
    $region21: #{tpu_custom_call.1} parent=1 // pred_fallthru
      _
    %157 = vsyncpa [#allocation3], 1
    %158 = vsyncpa [#allocation4], 1

</llo_original>
